<compile_context>
chip_gen: v7x
topology: tpu7x:2x2x1
jax: 0.10.0
libtpu: 0.0.40
codegen_flags: <defaults>
</compile_context>

<pallas_src>
import math

import jax
import jax.numpy as jnp
import numpy as np
from jax.experimental import pallas as pl
from jax.experimental.pallas import tpu as pltpu


_HM_OFF = 8  # sublane-aligned row offset of head_mask inside the packed cvec


# ------------------------------- kernel helpers ------------------------------


def _layernorm(v, g, b, eps=1e-5):
    mu = jnp.mean(v, axis=-1, keepdims=True)
    var = jnp.mean(jnp.square(v - mu), axis=-1, keepdims=True)
    return (v - mu) * jax.lax.rsqrt(var + eps) * g + b


def _erf(x):
    # Abramowitz & Stegun 7.1.26, |abs err| <= 1.5e-7 — numerically equivalent
    # to exact erf at the test tolerance; only uses VPU/EUP-safe primitives.
    a1, a2, a3, a4, a5 = (0.254829592, -0.284496736, 1.421413741,
                          -1.453152027, 1.061405429)
    p = 0.3275911
    sgn = jnp.where(x >= 0.0, 1.0, -1.0)
    ax = jnp.abs(x)
    t = 1.0 / (1.0 + p * ax)
    poly = ((((a5 * t + a4) * t + a3) * t + a2) * t + a1) * t
    return sgn * (1.0 - poly * jnp.exp(-ax * ax))


def _gelu_exact(x):
    return 0.5 * x * (1.0 + _erf(x * (1.0 / math.sqrt(2.0))))


# ---------------------------------- kernel -----------------------------------


def block_kernel(x_ref, bias_ref, ev_ref, cvec_ref, brow_ref, wqkv_ref,
                 w1wp_ref, w2_ref, o_ref):
    BT, C = x_ref.shape               # tokens flattened to (B*T, C)
    M = ev_ref.shape[0]               # H * B * T (block-diag key/head columns)
    n3c = wqkv_ref.shape[1]           # 3 * C
    hidden = w2_ref.shape[0]          # 4 * C

    ln1_g = cvec_ref[0:1, :]
    ln1_b = cvec_ref[1:2, :]
    ln2_g = cvec_ref[2:3, :]
    ln2_b = cvec_ref[3:4, :]
    bp = cvec_ref[4:5, :]
    b2 = cvec_ref[5:6, :]
    head_mask = cvec_ref[_HM_OFF:_HM_OFF + M, :]     # (M, C) 0/1 block-diag
    bqkv = brow_ref[0:1, 0:n3c]                      # (1, 3C)
    b1 = brow_ref[1:2, :]                            # (1, hidden)
    w1 = w1wp_ref[:, :hidden]                        # (C, 4C) bf16
    wp = w1wp_ref[:, hidden:hidden + C]              # (C, C)  bf16, 128-aligned

    x = x_ref[...]                                   # residual stream, f32

    # ------------------------------ attention -------------------------------
    h1 = _layernorm(x, ln1_g, ln1_b).astype(jnp.bfloat16)
    qkv = jnp.dot(h1, wqkv_ref[...], preferred_element_type=jnp.float32) + bqkv
    q = qkv[:, 0:C]                                  # pre-scaled by 1/sqrt(hd)
    k = qkv[:, C:2 * C]
    v = qkv[:, 2 * C:3 * C]

    # Block-diagonal head packing: kbd/vbd[h*BT + j, c] = k/v[j, c] iff channel
    # c belongs to head h.  One constant replication matmul + one 0/1 mask
    # multiply each — no per-head slicing, transposes or batched dots.
    ev = ev_ref[...]                                 # (M, BT) vertical-stacked I
    kbd = jnp.dot(ev, k, preferred_element_type=jnp.float32) * head_mask
    vbd = jnp.dot(ev, v, preferred_element_type=jnp.float32) * head_mask

    # All (head, key) score columns in one lane-dense (BT, M) tile.
    s = jax.lax.dot_general(
        q.astype(jnp.bfloat16), kbd.astype(jnp.bfloat16),
        (((1,), (1,)), ((), ())), preferred_element_type=jnp.float32)
    s = s + bias_ref[...]                            # 0 / -1e30 causal+batch mask

    # Per-head softmax without per-head slicing: the per-row max is a valid
    # shift (cancels in each head's normalization); per-head denominators are
    # recovered with one matmul against the 0/1 head mask; divide -> EUP recip.
    m = jnp.max(s, axis=-1, keepdims=True)
    p = jnp.exp(s - m)                               # masked columns -> 0
    l_c = jnp.dot(p, head_mask, preferred_element_type=jnp.float32)  # (BT, C)
    l_c = jnp.maximum(l_c, 1e-30)                    # guard (never hit: causal diag)
    y = jnp.dot(p.astype(jnp.bfloat16), vbd.astype(jnp.bfloat16),
                preferred_element_type=jnp.float32)
    y = y * pl.reciprocal(l_c, approx=True)          # heads already concat'd on lanes

    attn = jnp.dot(y.astype(jnp.bfloat16), wp,
                   preferred_element_type=jnp.float32) + bp
    x = x + attn                                     # attn/resid dropout: p=0 (eval)

    # -------------------------------- MLP -----------------------------------
    h2 = _layernorm(x, ln2_g, ln2_b).astype(jnp.bfloat16)
    mlp = jnp.dot(h2, w1, preferred_element_type=jnp.float32) + b1
    mlp = _gelu_exact(mlp)                           # exact-erf GELU, f32
    mlp = jnp.dot(mlp.astype(jnp.bfloat16), w2_ref[...],
                  preferred_element_type=jnp.float32) + b2

    o_ref[...] = x + mlp


# ----------------------------- one-time prepare ------------------------------


def prepare_block_params(params, mask, batch, seq, num_heads):
    """One-time fusion of Block parameters into the packed kernel operands.

    All concats, bf16 casts, scale folding, 0/1 expansion matrices and the
    additive attention mask live here — NOT in the per-call path."""
    B, T, H = batch, seq, num_heads
    C = params["wq"].shape[0]
    hd = C // H
    BT = B * T
    M = H * BT
    hidden = params["w1"].shape[1]
    assert hidden >= 3 * C
    scale = 1.0 / math.sqrt(hd)

    # Shape-only constants (numpy, built once).
    mask_tt = np.asarray(mask)[:T, :T] > 0
    allow = np.zeros((BT, M), np.float32)
    for b in range(B):
        for h in range(H):
            allow[b * T:(b + 1) * T,
                  h * BT + b * T: h * BT + (b + 1) * T] = mask_tt
    bias = np.where(allow > 0, 0.0, -1e30).astype(np.float32)     # (BT, M)

    ev = np.tile(np.eye(BT, dtype=np.float32), (H, 1))            # (M, BT)
    head_mask = np.zeros((M, C), np.float32)                      # (M, C)
    for h in range(H):
        head_mask[h * BT:(h + 1) * BT, h * hd:(h + 1) * hd] = 1.0

    # Parameter fusion (1/sqrt(hd) folded into the Q third; weights -> bf16).
    wqkv = jnp.concatenate([params["wq"] * scale, params["wk"], params["wv"]],
                           axis=1).astype(jnp.bfloat16)           # (C, 3C)
    bqkv = jnp.concatenate([params["bq"] * scale, params["bk"], params["bv"]],
                           axis=1)                                # (1, 3C) f32
    brow = jnp.concatenate(
        [jnp.pad(bqkv, ((0, 0), (0, hidden - 3 * C))), params["b1"]],
        axis=0)                                                   # (2, hidden)
    w1wp = jnp.concatenate([params["w1"], params["wp"]],
                           axis=1).astype(jnp.bfloat16)           # (C, hidden+C)
    w2 = params["w2"].astype(jnp.bfloat16)                        # (hidden, C)
    cvec = jnp.concatenate(
        [params["ln1_g"], params["ln1_b"], params["ln2_g"], params["ln2_b"],
         params["bp"], params["b2"],
         jnp.zeros((_HM_OFF - 6, C), jnp.float32),
         jnp.asarray(head_mask)], axis=0)                         # (_HM_OFF+M, C)

    return dict(bias=jnp.asarray(bias), ev=jnp.asarray(ev), cvec=cvec,
                brow=brow, wqkv=wqkv, w1wp=w1wp, w2=w2)


# ------------------------------- per-call path --------------------------------


@jax.jit
def block_forward(x, fused):
    """Per-call path: only reshape + a single grid-less pallas_call."""
    B, T, C = x.shape
    vmem = pl.BlockSpec(memory_space=pltpu.MemorySpace.VMEM)
    out = pl.pallas_call(
        block_kernel,
        out_shape=jax.ShapeDtypeStruct((B * T, C), jnp.float32),
        in_specs=[vmem] * 8,
        out_specs=vmem,
    )(x.reshape(B * T, C), fused["bias"], fused["ev"], fused["cvec"],
      fused["brow"], fused["wqkv"], fused["w1wp"], fused["w2"])
    return out.reshape(B, T, C)


# ------------------------------ mask / params --------------------------------


def build_attention_mask(attention, tokens_per_block, max_blocks):
    T = tokens_per_block * max_blocks
    causal = np.tril(np.ones((T, T), dtype=np.float32))
    if attention == "causal":
        mask = causal
    elif attention == "block_causal":
        block = np.zeros((T, T), dtype=np.float32)
        for i in range(max_blocks):
            s = i * tokens_per_block
            block[s:s + tokens_per_block, s:s + tokens_per_block] = 1.0
        mask = np.maximum(causal, block)
    else:
        raise ValueError(attention)
    return jnp.asarray(mask)


def init_block_params(key, embed_dim, scale=0.02):
    C, hidden = embed_dim, 4 * embed_dim
    ks = jax.random.split(key, 16)

    def lin(kw, kb, n_in, n_out):
        w = scale * jax.random.normal(kw, (n_in, n_out), jnp.float32)
        b = scale * jax.random.normal(kb, (1, n_out), jnp.float32)
        return w, b

    wq, bq = lin(ks[0], ks[1], C, C)
    wk, bk = lin(ks[2], ks[3], C, C)
    wv, bv = lin(ks[4], ks[5], C, C)
    wp, bp = lin(ks[6], ks[7], C, C)
    w1, b1 = lin(ks[8], ks[9], C, hidden)
    w2, b2 = lin(ks[10], ks[11], hidden, C)
    ln1_g = 1.0 + 0.1 * jax.random.normal(ks[12], (1, C), jnp.float32)
    ln1_b = 0.1 * jax.random.normal(ks[13], (1, C), jnp.float32)
    ln2_g = 1.0 + 0.1 * jax.random.normal(ks[14], (1, C), jnp.float32)
    ln2_b = 0.1 * jax.random.normal(ks[15], (1, C), jnp.float32)
    return dict(wq=wq, bq=bq, wk=wk, bk=bk, wv=wv, bv=bv, wp=wp, bp=bp,
                w1=w1, b1=b1, w2=w2, b2=b2,
                ln1_g=ln1_g, ln1_b=ln1_b, ln2_g=ln2_g, ln2_b=ln2_b)


# ---------------------------- pure-JAX reference ------------------------------


def _ref_ln(x, g, b, eps=1e-5):
    mu = x.mean(-1, keepdims=True)
    var = ((x - mu) ** 2).mean(-1, keepdims=True)
    return (x - mu) / jnp.sqrt(var + eps) * g + b


def reference_block(x, p, mask, num_heads):
    """Float32 reference matching the PyTorch Block forward (eval mode)."""
    B, T, C = x.shape
    hd = C // num_heads
    h = _ref_ln(x, p["ln1_g"], p["ln1_b"])
    q = (h @ p["wq"] + p["bq"]).reshape(B, T, num_heads, hd).transpose(0, 2, 1, 3)
    k = (h @ p["wk"] + p["bk"]).reshape(B, T, num_heads, hd).transpose(0, 2, 1, 3)
    v = (h @ p["wv"] + p["bv"]).reshape(B, T, num_heads, hd).transpose(0, 2, 1, 3)
    att = jnp.einsum("bhtd,bhsd->bhts", q, k) / math.sqrt(hd)
    att = jnp.where(mask[:T, :T] == 0, -jnp.inf, att)
    att = jax.nn.softmax(att, axis=-1)
    y = jnp.einsum("bhts,bhsd->bhtd", att, v)
    y = y.transpose(0, 2, 1, 3).reshape(B, T, C)
    y = y @ p["wp"] + p["bp"]
    x = x + y
    h2 = _ref_ln(x, p["ln2_g"], p["ln2_b"])
    m = jax.nn.gelu(h2 @ p["w1"] + p["b1"], approximate=False)
    return x + (m @ p["w2"] + p["b2"])


# ---------------------------------- main --------------------------------------

if __name__ == "__main__":
    # TransformerConfig: tokens_per_block=4, max_blocks=2 -> max_tokens=8,
    # attention='causal', num_heads=4, embed_dim=32, all dropout p = 0.0.
    TOKENS_PER_BLOCK, MAX_BLOCKS = 4, 2
    ATTENTION = "causal"
    NUM_HEADS, EMBED_DIM = 4, 32
    BATCH = 2
    SEQ = TOKENS_PER_BLOCK * MAX_BLOCKS

    key = jax.random.PRNGKey(0)
    kx, kp = jax.random.split(key)
    x = jax.random.normal(kx, (BATCH, SEQ, EMBED_DIM), jnp.float32)
    params = init_block_params(kp, EMBED_DIM)
    mask = build_attention_mask(ATTENTION, TOKENS_PER_BLOCK, MAX_BLOCKS)

    fused = prepare_block_params(params, mask, BATCH, SEQ, NUM_HEADS)
    out = block_forward(x, fused)
    out = jax.block_until_ready(out)

    ref = reference_block(x, params, mask, NUM_HEADS)
    np.testing.assert_allclose(np.asarray(out), np.asarray(ref),
                               rtol=1e-2, atol=1e-2)
    print("KERNEL_OK")
</pallas_src>

<mosaic_0001>
module attributes {stable_mosaic.version = 11 : i64} {
  func.func @block_kernel(%arg0: memref<16x32xf32, #tpu.memory_space<vmem>>, %arg1: memref<16x64xf32, #tpu.memory_space<vmem>>, %arg2: memref<64x16xf32, #tpu.memory_space<vmem>>, %arg3: memref<72x32xf32, #tpu.memory_space<vmem>>, %arg4: memref<2x128xf32, #tpu.memory_space<vmem>>, %arg5: memref<32x96xbf16, #tpu.memory_space<vmem>>, %arg6: memref<32x160xbf16, #tpu.memory_space<vmem>>, %arg7: memref<128x32xbf16, #tpu.memory_space<vmem>>, %arg8: memref<16x32xf32, #tpu.memory_space<vmem>>) attributes {dimension_semantics = [], scalar_prefetch = 0 : i64, scratch_operands = 0 : i64, tpu.core_type = #tpu.core_type<tc>} {
    %c0 = arith.constant 0 : index
    %c0_0 = arith.constant 0 : index
    %0 = vector.load %arg3[%c0, %c0_0] : memref<72x32xf32, #tpu.memory_space<vmem>>, vector<1x32xf32>
    %c1 = arith.constant 1 : index
    %c0_1 = arith.constant 0 : index
    %1 = vector.load %arg3[%c1, %c0_1] : memref<72x32xf32, #tpu.memory_space<vmem>>, vector<1x32xf32>
    %c2 = arith.constant 2 : index
    %c0_2 = arith.constant 0 : index
    %2 = vector.load %arg3[%c2, %c0_2] : memref<72x32xf32, #tpu.memory_space<vmem>>, vector<1x32xf32>
    %c3 = arith.constant 3 : index
    %c0_3 = arith.constant 0 : index
    %3 = vector.load %arg3[%c3, %c0_3] : memref<72x32xf32, #tpu.memory_space<vmem>>, vector<1x32xf32>
    %c4 = arith.constant 4 : index
    %c0_4 = arith.constant 0 : index
    %4 = vector.load %arg3[%c4, %c0_4] : memref<72x32xf32, #tpu.memory_space<vmem>>, vector<1x32xf32>
    %c5 = arith.constant 5 : index
    %c0_5 = arith.constant 0 : index
    %5 = vector.load %arg3[%c5, %c0_5] : memref<72x32xf32, #tpu.memory_space<vmem>>, vector<1x32xf32>
    %c8 = arith.constant 8 : index
    %c0_6 = arith.constant 0 : index
    %6 = vector.load %arg3[%c8, %c0_6] : memref<72x32xf32, #tpu.memory_space<vmem>>, vector<64x32xf32>
    %c0_7 = arith.constant 0 : index
    %c0_8 = arith.constant 0 : index
    %7 = vector.load %arg4[%c0_7, %c0_8] : memref<2x128xf32, #tpu.memory_space<vmem>>, vector<1x96xf32>
    %c1_9 = arith.constant 1 : index
    %c0_10 = arith.constant 0 : index
    %8 = vector.load %arg4[%c1_9, %c0_10] : memref<2x128xf32, #tpu.memory_space<vmem>>, vector<1x128xf32>
    %c0_11 = arith.constant 0 : index
    %c0_12 = arith.constant 0 : index
    %9 = vector.load %arg6[%c0_11, %c0_12] : memref<32x160xbf16, #tpu.memory_space<vmem>>, vector<32x128xbf16>
    %c0_13 = arith.constant 0 : index
    %c128 = arith.constant 128 : index
    %10 = vector.load %arg6[%c0_13, %c128] : memref<32x160xbf16, #tpu.memory_space<vmem>>, vector<32x32xbf16>
    %c0_14 = arith.constant 0 : index
    %c0_15 = arith.constant 0 : index
    %11 = vector.load %arg0[%c0_14, %c0_15] : memref<16x32xf32, #tpu.memory_space<vmem>>, vector<16x32xf32>
    %cst = arith.constant dense<0.000000e+00> : vector<16xf32>
    %12 = vector.multi_reduction <add>, %11, %cst [1] : vector<16x32xf32> to vector<16xf32>
    %13 = vector.shape_cast %12 : vector<16xf32> to vector<16x1xf32>
    %cst_16 = arith.constant 3.200000e+01 : f32
    %14 = vector.broadcast %cst_16 : f32 to vector<16x1xf32>
    %15 = arith.divf %13, %14 : vector<16x1xf32>
    %16 = vector.broadcast %15 : vector<16x1xf32> to vector<16x32xf32>
    %17 = arith.subf %11, %16 : vector<16x32xf32>
    %18 = arith.mulf %17, %17 : vector<16x32xf32>
    %cst_17 = arith.constant dense<0.000000e+00> : vector<16xf32>
    %19 = vector.multi_reduction <add>, %18, %cst_17 [1] : vector<16x32xf32> to vector<16xf32>
    %20 = vector.shape_cast %19 : vector<16xf32> to vector<16x1xf32>
    %cst_18 = arith.constant 3.200000e+01 : f32
    %21 = vector.broadcast %cst_18 : f32 to vector<16x1xf32>
    %22 = arith.divf %20, %21 : vector<16x1xf32>
    %23 = vector.broadcast %15 : vector<16x1xf32> to vector<16x32xf32>
    %24 = arith.subf %11, %23 : vector<16x32xf32>
    %cst_19 = arith.constant 9.99999974E-6 : f32
    %25 = vector.broadcast %cst_19 : f32 to vector<16x1xf32>
    %26 = arith.addf %22, %25 : vector<16x1xf32>
    %27 = math.rsqrt %26 : vector<16x1xf32>
    %28 = vector.broadcast %27 : vector<16x1xf32> to vector<16x32xf32>
    %29 = arith.mulf %24, %28 : vector<16x32xf32>
    %30 = vector.broadcast %0 : vector<1x32xf32> to vector<16x32xf32>
    %31 = arith.mulf %29, %30 : vector<16x32xf32>
    %32 = vector.broadcast %1 : vector<1x32xf32> to vector<16x32xf32>
    %33 = arith.addf %31, %32 : vector<16x32xf32>
    %34 = arith.truncf %33 : vector<16x32xf32> to vector<16x32xbf16>
    %c0_20 = arith.constant 0 : index
    %c0_21 = arith.constant 0 : index
    %35 = vector.load %arg5[%c0_20, %c0_21] : memref<32x96xbf16, #tpu.memory_space<vmem>>, vector<32x96xbf16>
    %cst_22 = arith.constant dense<0.000000e+00> : vector<16x96xf32>
    %36 = tpu.matmul %34, %35, %cst_22 {dimension_numbers = #tpu.dot_dimension_numbers<[1], [0], [0], [1], [0, 0, 1, 1], [], []>} : vector<16x32xbf16>, vector<32x96xbf16>, vector<16x96xf32> -> vector<16x96xf32>
    %37 = vector.broadcast %7 : vector<1x96xf32> to vector<16x96xf32>
    %38 = arith.addf %36, %37 : vector<16x96xf32>
    %39 = vector.extract_strided_slice %38 {offsets = [0, 0], sizes = [16, 32], strides = [1, 1]} : vector<16x96xf32> to vector<16x32xf32>
    %40 = vector.extract_strided_slice %38 {offsets = [0, 32], sizes = [16, 32], strides = [1, 1]} : vector<16x96xf32> to vector<16x32xf32>
    %41 = vector.extract_strided_slice %38 {offsets = [0, 64], sizes = [16, 32], strides = [1, 1]} : vector<16x96xf32> to vector<16x32xf32>
    %c0_23 = arith.constant 0 : index
    %c0_24 = arith.constant 0 : index
    %42 = vector.load %arg2[%c0_23, %c0_24] : memref<64x16xf32, #tpu.memory_space<vmem>>, vector<64x16xf32>
    %cst_25 = arith.constant dense<0.000000e+00> : vector<64x32xf32>
    %43 = tpu.matmul %42, %40, %cst_25 {dimension_numbers = #tpu.dot_dimension_numbers<[1], [0], [0], [1], [0, 0, 1, 1], [], []>} : vector<64x16xf32>, vector<16x32xf32>, vector<64x32xf32> -> vector<64x32xf32>
    %44 = arith.mulf %43, %6 : vector<64x32xf32>
    %cst_26 = arith.constant dense<0.000000e+00> : vector<64x32xf32>
    %45 = tpu.matmul %42, %41, %cst_26 {dimension_numbers = #tpu.dot_dimension_numbers<[1], [0], [0], [1], [0, 0, 1, 1], [], []>} : vector<64x16xf32>, vector<16x32xf32>, vector<64x32xf32> -> vector<64x32xf32>
    %46 = arith.mulf %45, %6 : vector<64x32xf32>
    %47 = arith.truncf %39 : vector<16x32xf32> to vector<16x32xbf16>
    %48 = arith.truncf %44 : vector<64x32xf32> to vector<64x32xbf16>
    %cst_27 = arith.constant dense<0.000000e+00> : vector<16x64xf32>
    %49 = tpu.matmul %47, %48, %cst_27 {dimension_numbers = #tpu.dot_dimension_numbers<[1], [1], [0], [0], [0, 0, 1, 0], [], []>} : vector<16x32xbf16>, vector<64x32xbf16>, vector<16x64xf32> -> vector<16x64xf32>
    %c0_28 = arith.constant 0 : index
    %c0_29 = arith.constant 0 : index
    %50 = vector.load %arg1[%c0_28, %c0_29] : memref<16x64xf32, #tpu.memory_space<vmem>>, vector<16x64xf32>
    %51 = arith.addf %49, %50 : vector<16x64xf32>
    %cst_30 = arith.constant dense<0xFF800000> : vector<16xf32>
    %52 = vector.multi_reduction <maximumf>, %51, %cst_30 [1] : vector<16x64xf32> to vector<16xf32>
    %53 = vector.shape_cast %52 : vector<16xf32> to vector<16x1xf32>
    %54 = vector.broadcast %53 : vector<16x1xf32> to vector<16x64xf32>
    %55 = arith.subf %51, %54 : vector<16x64xf32>
    %56 = math.exp %55 : vector<16x64xf32>
    %cst_31 = arith.constant dense<0.000000e+00> : vector<16x32xf32>
    %57 = tpu.matmul %56, %6, %cst_31 {dimension_numbers = #tpu.dot_dimension_numbers<[1], [0], [0], [1], [0, 0, 1, 1], [], []>} : vector<16x64xf32>, vector<64x32xf32>, vector<16x32xf32> -> vector<16x32xf32>
    %cst_32 = arith.constant 1.000000e-30 : f32
    %58 = vector.broadcast %cst_32 : f32 to vector<16x32xf32>
    %59 = arith.maximumf %57, %58 : vector<16x32xf32>
    %60 = arith.truncf %56 : vector<16x64xf32> to vector<16x64xbf16>
    %61 = arith.truncf %46 : vector<64x32xf32> to vector<64x32xbf16>
    %cst_33 = arith.constant dense<0.000000e+00> : vector<16x32xf32>
    %62 = tpu.matmul %60, %61, %cst_33 {dimension_numbers = #tpu.dot_dimension_numbers<[1], [0], [0], [1], [0, 0, 1, 1], [], []>} : vector<16x64xbf16>, vector<64x32xbf16>, vector<16x32xf32> -> vector<16x32xf32>
    %63 = tpu.reciprocal %59 {approx = true} : vector<16x32xf32> -> vector<16x32xf32>
    %64 = arith.mulf %62, %63 : vector<16x32xf32>
    %65 = arith.truncf %64 : vector<16x32xf32> to vector<16x32xbf16>
    %cst_34 = arith.constant dense<0.000000e+00> : vector<16x32xf32>
    %66 = tpu.matmul %65, %10, %cst_34 {dimension_numbers = #tpu.dot_dimension_numbers<[1], [0], [0], [1], [0, 0, 1, 1], [], []>} : vector<16x32xbf16>, vector<32x32xbf16>, vector<16x32xf32> -> vector<16x32xf32>
    %67 = vector.broadcast %4 : vector<1x32xf32> to vector<16x32xf32>
    %68 = arith.addf %66, %67 : vector<16x32xf32>
    %69 = arith.addf %11, %68 : vector<16x32xf32>
    %cst_35 = arith.constant dense<0.000000e+00> : vector<16xf32>
    %70 = vector.multi_reduction <add>, %69, %cst_35 [1] : vector<16x32xf32> to vector<16xf32>
    %71 = vector.shape_cast %70 : vector<16xf32> to vector<16x1xf32>
    %cst_36 = arith.constant 3.200000e+01 : f32
    %72 = vector.broadcast %cst_36 : f32 to vector<16x1xf32>
    %73 = arith.divf %71, %72 : vector<16x1xf32>
    %74 = vector.broadcast %73 : vector<16x1xf32> to vector<16x32xf32>
    %75 = arith.subf %69, %74 : vector<16x32xf32>
    %76 = arith.mulf %75, %75 : vector<16x32xf32>
    %cst_37 = arith.constant dense<0.000000e+00> : vector<16xf32>
    %77 = vector.multi_reduction <add>, %76, %cst_37 [1] : vector<16x32xf32> to vector<16xf32>
    %78 = vector.shape_cast %77 : vector<16xf32> to vector<16x1xf32>
    %cst_38 = arith.constant 3.200000e+01 : f32
    %79 = vector.broadcast %cst_38 : f32 to vector<16x1xf32>
    %80 = arith.divf %78, %79 : vector<16x1xf32>
    %81 = vector.broadcast %73 : vector<16x1xf32> to vector<16x32xf32>
    %82 = arith.subf %69, %81 : vector<16x32xf32>
    %cst_39 = arith.constant 9.99999974E-6 : f32
    %83 = vector.broadcast %cst_39 : f32 to vector<16x1xf32>
    %84 = arith.addf %80, %83 : vector<16x1xf32>
    %85 = math.rsqrt %84 : vector<16x1xf32>
    %86 = vector.broadcast %85 : vector<16x1xf32> to vector<16x32xf32>
    %87 = arith.mulf %82, %86 : vector<16x32xf32>
    %88 = vector.broadcast %2 : vector<1x32xf32> to vector<16x32xf32>
    %89 = arith.mulf %87, %88 : vector<16x32xf32>
    %90 = vector.broadcast %3 : vector<1x32xf32> to vector<16x32xf32>
    %91 = arith.addf %89, %90 : vector<16x32xf32>
    %92 = arith.truncf %91 : vector<16x32xf32> to vector<16x32xbf16>
    %cst_40 = arith.constant dense<0.000000e+00> : vector<16x128xf32>
    %93 = tpu.matmul %92, %9, %cst_40 {dimension_numbers = #tpu.dot_dimension_numbers<[1], [0], [0], [1], [0, 0, 1, 1], [], []>} : vector<16x32xbf16>, vector<32x128xbf16>, vector<16x128xf32> -> vector<16x128xf32>
    %94 = vector.broadcast %8 : vector<1x128xf32> to vector<16x128xf32>
    %95 = arith.addf %93, %94 : vector<16x128xf32>
    %cst_41 = arith.constant 5.000000e-01 : f32
    %96 = vector.broadcast %cst_41 : f32 to vector<16x128xf32>
    %97 = arith.mulf %96, %95 : vector<16x128xf32>
    %cst_42 = arith.constant 0.707106769 : f32
    %98 = vector.broadcast %cst_42 : f32 to vector<16x128xf32>
    %99 = arith.mulf %95, %98 : vector<16x128xf32>
    %cst_43 = arith.constant 0.000000e+00 : f32
    %100 = vector.broadcast %cst_43 : f32 to vector<16x128xf32>
    %101 = arith.cmpf oge, %99, %100 : vector<16x128xf32>
    %cst_44 = arith.constant 1.000000e+00 : f32
    %cst_45 = arith.constant -1.000000e+00 : f32
    %102 = vector.broadcast %cst_44 : f32 to vector<16x128xf32>
    %103 = vector.broadcast %cst_45 : f32 to vector<16x128xf32>
    %104 = arith.select %101, %102, %103 : vector<16x128xi1>, vector<16x128xf32>
    %105 = math.absf %99 : vector<16x128xf32>
    %cst_46 = arith.constant 0.327591091 : f32
    %106 = vector.broadcast %cst_46 : f32 to vector<16x128xf32>
    %107 = arith.mulf %106, %105 : vector<16x128xf32>
    %cst_47 = arith.constant 1.000000e+00 : f32
    %108 = vector.broadcast %cst_47 : f32 to vector<16x128xf32>
    %109 = arith.addf %108, %107 : vector<16x128xf32>
    %cst_48 = arith.constant 1.000000e+00 : f32
    %110 = vector.broadcast %cst_48 : f32 to vector<16x128xf32>
    %111 = arith.divf %110, %109 : vector<16x128xf32>
    %cst_49 = arith.constant 1.06140542 : f32
    %112 = vector.broadcast %cst_49 : f32 to vector<16x128xf32>
    %113 = arith.mulf %112, %111 : vector<16x128xf32>
    %cst_50 = arith.constant -1.45315206 : f32
    %114 = vector.broadcast %cst_50 : f32 to vector<16x128xf32>
    %115 = arith.addf %113, %114 : vector<16x128xf32>
    %116 = arith.mulf %115, %111 : vector<16x128xf32>
    %cst_51 = arith.constant 1.42141378 : f32
    %117 = vector.broadcast %cst_51 : f32 to vector<16x128xf32>
    %118 = arith.addf %116, %117 : vector<16x128xf32>
    %119 = arith.mulf %118, %111 : vector<16x128xf32>
    %cst_52 = arith.constant -0.284496725 : f32
    %120 = vector.broadcast %cst_52 : f32 to vector<16x128xf32>
    %121 = arith.addf %119, %120 : vector<16x128xf32>
    %122 = arith.mulf %121, %111 : vector<16x128xf32>
    %cst_53 = arith.constant 0.254829586 : f32
    %123 = vector.broadcast %cst_53 : f32 to vector<16x128xf32>
    %124 = arith.addf %122, %123 : vector<16x128xf32>
    %125 = arith.mulf %124, %111 : vector<16x128xf32>
    %cst_54 = arith.constant 0.000000e+00 : f32
    %126 = vector.broadcast %cst_54 : f32 to vector<16x128xf32>
    %127 = arith.subf %126, %105 : vector<16x128xf32>
    %128 = arith.mulf %127, %105 : vector<16x128xf32>
    %129 = math.exp %128 : vector<16x128xf32>
    %130 = arith.mulf %125, %129 : vector<16x128xf32>
    %cst_55 = arith.constant 1.000000e+00 : f32
    %131 = vector.broadcast %cst_55 : f32 to vector<16x128xf32>
    %132 = arith.subf %131, %130 : vector<16x128xf32>
    %133 = arith.mulf %104, %132 : vector<16x128xf32>
    %cst_56 = arith.constant 1.000000e+00 : f32
    %134 = vector.broadcast %cst_56 : f32 to vector<16x128xf32>
    %135 = arith.addf %134, %133 : vector<16x128xf32>
    %136 = arith.mulf %97, %135 : vector<16x128xf32>
    %137 = arith.truncf %136 : vector<16x128xf32> to vector<16x128xbf16>
    %c0_57 = arith.constant 0 : index
    %c0_58 = arith.constant 0 : index
    %138 = vector.load %arg7[%c0_57, %c0_58] : memref<128x32xbf16, #tpu.memory_space<vmem>>, vector<128x32xbf16>
    %cst_59 = arith.constant dense<0.000000e+00> : vector<16x32xf32>
    %139 = tpu.matmul %137, %138, %cst_59 {dimension_numbers = #tpu.dot_dimension_numbers<[1], [0], [0], [1], [0, 0, 1, 1], [], []>} : vector<16x128xbf16>, vector<128x32xbf16>, vector<16x32xf32> -> vector<16x32xf32>
    %140 = vector.broadcast %5 : vector<1x32xf32> to vector<16x32xf32>
    %141 = arith.addf %139, %140 : vector<16x32xf32>
    %142 = arith.addf %69, %141 : vector<16x32xf32>
    %c0_60 = arith.constant 0 : index
    %c0_61 = arith.constant 0 : index
    %143 = vector.load %arg8[%c0_60, %c0_61] : memref<16x32xf32, #tpu.memory_space<vmem>>, vector<16x32xf32>
    tpu.vector_store %arg8[%c0_60, %c0_61], %142 {strides = array<i32>} : memref<16x32xf32, #tpu.memory_space<vmem>>, vector<16x32xf32>,
    return
  }
}

</mosaic_0001>

<llo_original>
// kernel: block_forward.1
$region0: #{block_forward.1}
  #allocation0 [shape = 'u32[]', space=smem, size = 0x4, offset = 0x4, fixed_abs, tag = 'smem constant byte address 0x4 - core index']
  #allocation1 [shape = 'u32[144,128]{1,0:T(1,128)}', space=vmem, size = 0x12000, scoped, tag = 'internal scratch']
  %s0 = inlined_call_operand.vmem [shape: f32[16,32], index: 0, kind: input, shape index: {}]
  %s1 = inlined_call_operand.vmem [shape: f32[16,64], index: 1, kind: input, shape index: {}]
  %s2 = inlined_call_operand.vmem [shape: f32[64,16], index: 2, kind: input, shape index: {}]
  %s3 = inlined_call_operand.vmem [shape: f32[72,32], index: 3, kind: input, shape index: {}]
  %s4 = inlined_call_operand.vmem [shape: f32[2,128], index: 4, kind: input, shape index: {}]
  %s5 = inlined_call_operand.vmem [shape: bf16[32,96], index: 5, kind: input, shape index: {}]
  %s6 = inlined_call_operand.vmem [shape: bf16[32,160], index: 6, kind: input, shape index: {}]
  %s7 = inlined_call_operand.vmem [shape: bf16[128,32], index: 7, kind: input, shape index: {}]
  %s8 = inlined_call_operand.hbm [shape: f32[16,32], index: 8, kind: output, shape index: {}]
  %s9 = sld [smem:[#allocation0]]
  $region42: #{block_forward.1} parent=0
    _
  %s11 = ssub.s32 1, %s9
  %s12 = scalar_select 0, %s11, %s9
  $region1: #{block_forward.1} parent=0
    #allocation2 [shape = 'u8[8192]{0}', space=vmem, size = 0x2000, scoped, tag = 'output window, operand 0, single buffered']
    #allocation3 [shape = 's32[1]{0}', space=sflag, size = 0x4, scoped, tag = 'scoped memory for block_forward.1']
    %13 = vsyncpa [#allocation3], 0
    // Predicated region
    $region2: #{block_forward.1} parent=1 // pred_check
      _
    $region3: #{block_forward.1} parent=1 // pred_check_branch
      %15 = sbr.rel (0) target = $region5
    $region4: #{block_forward.1} parent=1 // pred_region
      _
    $region5: #{block_forward.1} parent=1 // pred_fallthru
      _
    // Predicated region
    $region6: #{block_forward.1} parent=1 // pred_check
      _
    $region7: #{block_forward.1} parent=1 // pred_check_branch
      %17 = sbr.rel (0) target = $region9
    $region8: #{block_forward.1} parent=1 // pred_region
      _
    $region9: #{block_forward.1} parent=1 // pred_fallthru
      _
    // Predicated region
    $region10: #{block_forward.1} parent=1 // pred_check
      _
    $region11: #{block_forward.1} parent=1 // pred_check_branch
      %19 = sbr.rel (0) target = $region13
    $region12: #{block_forward.1} parent=1 // pred_region
      _
    $region13: #{block_forward.1} parent=1 // pred_fallthru
      _
    // Predicated region
    $region14: #{block_forward.1} parent=1 // pred_check
      _
    $region15: #{block_forward.1} parent=1 // pred_check_branch
      %21 = sbr.rel (0) target = $region17
    $region16: #{block_forward.1} parent=1 // pred_region
      _
    $region17: #{block_forward.1} parent=1 // pred_fallthru
      _
    // Predicated region
    $region18: #{block_forward.1} parent=1 // pred_check
      _
    $region19: #{block_forward.1} parent=1 // pred_check_branch
      %23 = sbr.rel (0) target = $region21
    $region20: #{block_forward.1} parent=1 // pred_region
      _
    $region21: #{block_forward.1} parent=1 // pred_fallthru
      _
    // Predicated region
    $region22: #{block_forward.1} parent=1 // pred_check
      _
    $region23: #{block_forward.1} parent=1 // pred_check_branch
      %25 = sbr.rel (0) target = $region25
    $region24: #{block_forward.1} parent=1 // pred_region
      _
    $region25: #{block_forward.1} parent=1 // pred_fallthru
      _
    // Predicated region
    $region26: #{block_forward.1} parent=1 // pred_check
      _
    $region27: #{block_forward.1} parent=1 // pred_check_branch
      %27 = sbr.rel (0) target = $region29
    $region28: #{block_forward.1} parent=1 // pred_region
      _
    $region29: #{block_forward.1} parent=1 // pred_fallthru
      _
    // Predicated region
    $region30: #{block_forward.1} parent=1 // pred_check
      _
    $region31: #{block_forward.1} parent=1 // pred_check_branch
      %29 = sbr.rel (0) target = $region33
    $region32: #{block_forward.1} parent=1 // pred_region
      _
    $region33: #{block_forward.1} parent=1 // pred_fallthru
      _
    %v31 = vld [vmem:[%s3] sm:$0x1]
    %v32 = vld [vmem:[%s3 + $0x1] sm:$0x1]
    %v33 = vld [vmem:[%s3 + $0x2] sm:$0x1]
    %v34 = vld [vmem:[%s3 + $0x3] sm:$0x1]
    %v35 = vld [vmem:[%s3 + $0x4] sm:$0x1]
    %v36 = vld [vmem:[%s3 + $0x5] sm:$0x1]
    %v37 = vld [vmem:[%s3 + $0x8] sm:$0xff]
    %v38 = vld [vmem:[%s3 + $0x10] sm:$0xff]
    %v39 = vld [vmem:[%s3 + $0x18] sm:$0xff]
    %v40 = vld [vmem:[%s3 + $0x20] sm:$0xff]
    %v41 = vld [vmem:[%s3 + $0x28] sm:$0xff]
    %v42 = vld [vmem:[%s3 + $0x30] sm:$0xff]
    %v43 = vld [vmem:[%s3 + $0x38] sm:$0xff]
    %v44 = vld [vmem:[%s3 + $0x40] sm:$0xff]
    %v45 = vld [vmem:[%s4] sm:$0x1]
    %v46 = vld [vmem:[%s4 + $0x1] sm:$0x1]
    %v47 = vld [vmem:[%s6] sm:$0xf]
    %v48 = vld [vmem:[%s6 + $0x8] sm:$0xf]
    %v49 = vld [vmem:[%s6 + $0x10] sm:$0xf]
    %v50 = vld [vmem:[%s6 + $0x18] sm:$0xf]
    %v51 = vld [vmem:[%s6 + $0x4] sm:$0xf]
    %v52 = vld [vmem:[%s6 + $0xc] sm:$0xf]
    %v53 = vld [vmem:[%s6 + $0x14] sm:$0xf]
    %v54 = vld [vmem:[%s6 + $0x1c] sm:$0xf]
    %v55 = vld [vmem:[%s0] sm:$0xff]
    %v56 = vld [vmem:[%s0 + $0x8] sm:$0xff]
    %vm57 = vcmask 261120
    %v58 = vsel %vm57, %v55, 0.0
    %59 = vadd.xlane.f32.xlu0 %v58
    %v60 = vpop.xlane.xlu0 %59
    %v61 = vsel %vm57, %v56, 0.0
    %62 = vadd.xlane.f32.xlu0 %v61
    %v63 = vpop.xlane.xlu0 %62
    %v64 = vrcp.pop 32.0
    %v65 = vmul.f32 %v60, %v64
    %v66 = vmul.f32 %v63, %v64
    %v67 = vsub.f32 %v55, %v65
    %v68 = vsub.f32 %v56, %v66
    %v69 = vmul.f32 %v67, %v67
    %v70 = vmul.f32 %v68, %v68
    %v71 = vsel %vm57, %v69, 0.0
    %72 = vadd.xlane.f32.xlu0 %v71
    %v73 = vpop.xlane.xlu0 %72
    %v74 = vsel %vm57, %v70, 0.0
    %75 = vadd.xlane.f32.xlu0 %v74
    %v76 = vpop.xlane.xlu0 %75
    %v77 = vmul.f32 %v73, %v64
    %v78 = vmul.f32 %v76, %v64
    %v79 = vadd.f32 %v77, 1e-05
    %v80 = vadd.f32 %v78, 1e-05
    %v81 = vrsqrt.pop %v79
    %v82 = vrsqrt.pop %v80
    %v83 = vmul.f32 %v67, %v81
    %v84 = vmul.f32 %v68, %v82
    %v85 = vlaneseq
    %v86 = vshrl.u32 %v85, 7
    %v87 = vsub.s32 0, %v86
    %v88 = vrot.slane %v31, %v87
    %v89 = vmul.f32 %v83, %v88
    %v90 = vmul.f32 %v84, %v88
    %v91 = vlaneseq
    %v92 = vshrl.u32 %v91, 7
    %v93 = vsub.s32 0, %v92
    %v94 = vrot.slane %v32, %v93
    %v95 = vadd.f32 %v89, %v94
    %v96 = vadd.f32 %v90, %v94
    %v97 = vpack.c.bf16 %v96, %v95
    %v98 = vld [vmem:[%s5] sm:$0xf]
    %v99 = vld [vmem:[%s5 + $0x4] sm:$0xf]
    %v100 = vld [vmem:[%s5 + $0x8] sm:$0xf]
    %v101 = vld [vmem:[%s5 + $0xc] sm:$0xf]
    %v102 = vlaneseq
    %v103 = vshrl.u32 %v102, 7
    %v104 = vsub.s32 0, %v103
    %v105 = vrot.slane %v45, %v104
    %v110 = vunpack.c.l.b16 %v98
    %v111 = vunpack.c.l.b16 %v99
    %v112 = vunpack.c.l.b16 %v100
    %v113 = vunpack.c.l.b16 %v101
    %v114 = vpack.c.b16 %v111, %v110
    %v115 = vpack.c.b16 %v113, %v112
    %v119 = vsel %vm57, %v97, 0
    %121 = vmatprep.subr.bf16.mxu0 0
    %122 = vmatpush1.bf16.msra.mxu0 %v114
    %123 = vmatprep.subr.bf16.mxu0 0
    %124 = vmatpush1.bf16.msra.mxu0 %v115
    %125 = vmatprep.subr.bf16.mxu0 0
    %126 = vmatpush1.bf16.msra.mxu0 0
    %127 = vmatprep.subr.bf16.mxu0 0
    %128 = vmatpush1.bf16.msra.mxu0 0
    %129 = vmatprep.subr.bf16.mxu0 0
    %130 = vmatpush1.bf16.msra.mxu0 0
    %131 = vmatprep.subr.bf16.mxu0 0
    %132 = vmatpush1.bf16.msra.mxu0 0
    %133 = vmatprep.subr.bf16.mxu0 0
    %134 = vmatpush1.bf16.msra.mxu0 0
    %135 = vmatprep.subr.bf16.mxu0 0
    %136 = vmatpush1.bf16.msra.mxu0 0
    %137 = vmatprep.subr.bf16.mxu0 0
    %138 = vmatpush1.bf16.msra.mxu0 0
    %139 = vmatprep.subr.bf16.mxu0 0
    %140 = vmatpush1.bf16.msra.mxu0 0
    %141 = vmatprep.subr.bf16.mxu0 0
    %142 = vmatpush1.bf16.msra.mxu0 0
    %143 = vmatprep.subr.bf16.mxu0 0
    %144 = vmatpush1.bf16.msra.mxu0 0
    %145 = vmatprep.subr.bf16.mxu0 0
    %146 = vmatpush1.bf16.msra.mxu0 0
    %147 = vmatprep.subr.bf16.mxu0 0
    %148 = vmatpush1.bf16.msra.mxu0 0
    %149 = vmatprep.subr.bf16.mxu0 0
    %150 = vmatpush1.bf16.msra.mxu0 0
    %151 = vmatprep.subr.bf16.mxu0 0
    %152 = vmatpush1.bf16.msra.mxu0 0
    %153 = vmatprep.mubr.bf16.mxu0 0
    %154 = vmatmul.mubr.bf16.gmra.mrb[0].mxu0 %v119
    %v155 = vpop.f32.mrb[0].mxu0
    %v156 = vadd.f32 %v105, %v155
    %v157 = vpop.f32.mrb[0].mxu0
    %v158 = vpop.f32.mrb[0].mxu0
    %v159 = vadd.f32 %v105, %v158
    %v160 = vpop.f32.mrb[0].mxu0
    %161 = vdwg.mxu0
    %v162 = vld [vmem:[%s2] sm:$0xff]
    %v163 = vld [vmem:[%s2 + $0x8] sm:$0xff]
    %v164 = vld [vmem:[%s2 + $0x10] sm:$0xff]
    %v165 = vld [vmem:[%s2 + $0x18] sm:$0xff]
    %v166 = vld [vmem:[%s2 + $0x20] sm:$0xff]
    %v167 = vld [vmem:[%s2 + $0x28] sm:$0xff]
    %v168 = vld [vmem:[%s2 + $0x30] sm:$0xff]
    %v169 = vld [vmem:[%s2 + $0x38] sm:$0xff]
    %172 = vrot.lane.b32.xlu0 %v156, 96
    %v173 = vpop.permute.xlu0 %172
    %174 = vrot.lane.b32.xlu0 %v159, 96
    %v175 = vpop.permute.xlu0 %174
    %vm178 = vcmask 130048
    %v180 = vsel %vm178, %v162, 0
    %v183 = vsel %vm178, %v163, 0
    %v186 = vsel %vm178, %v164, 0
    %v189 = vsel %vm178, %v165, 0
    %v192 = vsel %vm178, %v166, 0
    %v195 = vsel %vm178, %v167, 0
    %v198 = vsel %vm178, %v168, 0
    %v201 = vsel %vm178, %v169, 0
    %203 = vmatprep.subr.mxu0 0.0
    %204 = vmatpush1.msra.mxu0 %v173
    %205 = vmatprep.subr.mxu0 0.0
    %206 = vmatpush1.msra.mxu0 %v175
    %207 = vmatprep.subr.mxu0 0.0
    %208 = vmatpush1.msra.mxu0 0.0
    %209 = vmatprep.subr.mxu0 0.0
    %210 = vmatpush1.msra.mxu0 0.0
    %211 = vmatprep.subr.mxu0 0.0
    %212 = vmatpush1.msra.mxu0 0.0
    %213 = vmatprep.subr.mxu0 0.0
    %214 = vmatpush1.msra.mxu0 0.0
    %215 = vmatprep.subr.mxu0 0.0
    %216 = vmatpush1.msra.mxu0 0.0
    %217 = vmatprep.subr.mxu0 0.0
    %218 = vmatpush1.msra.mxu0 0.0
    %219 = vmatprep.subr.mxu0 0.0
    %220 = vmatpush1.msra.mxu0 0.0
    %221 = vmatprep.subr.mxu0 0.0
    %222 = vmatpush1.msra.mxu0 0.0
    %223 = vmatprep.subr.mxu0 0.0
    %224 = vmatpush1.msra.mxu0 0.0
    %225 = vmatprep.subr.mxu0 0.0
    %226 = vmatpush1.msra.mxu0 0.0
    %227 = vmatprep.subr.mxu0 0.0
    %228 = vmatpush1.msra.mxu0 0.0
    %229 = vmatprep.subr.mxu0 0.0
    %230 = vmatpush1.msra.mxu0 0.0
    %231 = vmatprep.subr.mxu0 0.0
    %232 = vmatpush1.msra.mxu0 0.0
    %233 = vmatprep.subr.mxu0 0.0
    %234 = vmatpush1.msra.mxu0 0.0
    %235 = vmatprep.subr.mxu0 0.0
    %236 = vmatpush1.msra.mxu0 0.0
    %237 = vmatprep.subr.mxu0 0.0
    %238 = vmatpush1.msra.mxu0 0.0
    %239 = vmatprep.subr.mxu0 0.0
    %240 = vmatpush1.msra.mxu0 0.0
    %241 = vmatprep.subr.mxu0 0.0
    %242 = vmatpush1.msra.mxu0 0.0
    %243 = vmatprep.subr.mxu0 0.0
    %244 = vmatpush1.msra.mxu0 0.0
    %245 = vmatprep.subr.mxu0 0.0
    %246 = vmatpush1.msra.mxu0 0.0
    %247 = vmatprep.subr.mxu0 0.0
    %248 = vmatpush1.msra.mxu0 0.0
    %249 = vmatprep.subr.mxu0 0.0
    %250 = vmatpush1.msra.mxu0 0.0
    %251 = vmatprep.subr.mxu0 0.0
    %252 = vmatpush1.msra.mxu0 0.0
    %253 = vmatprep.subr.mxu0 0.0
    %254 = vmatpush1.msra.mxu0 0.0
    %255 = vmatprep.subr.mxu0 0.0
    %256 = vmatpush1.msra.mxu0 0.0
    %257 = vmatprep.subr.mxu0 0.0
    %258 = vmatpush1.msra.mxu0 0.0
    %259 = vmatprep.subr.mxu0 0.0
    %260 = vmatpush1.msra.mxu0 0.0
    %261 = vmatprep.subr.mxu0 0.0
    %262 = vmatpush1.msra.mxu0 0.0
    %263 = vmatprep.subr.mxu0 0.0
    %264 = vmatpush1.msra.mxu0 0.0
    %265 = vmatprep.subr.mxu0 0.0
    %266 = vmatpush1.msra.mxu0 0.0
    %267 = vmatprep.mubr.f32.mxu0 0.0
    %268 = vmatmul.mubr.f32.gmra.mrb[0].mxu0 %v180
    %v269 = vpop.f32.mrb[0].mxu0
    %v270 = vadd.f32 0.0, %v269
    %v271 = vpop.f32.mrb[0].mxu0
    %272 = vmatprep.mubr.f32.mxu0 0.0
    %273 = vmatmul.mubr.f32.gmra.mrb[0].mxu0 %v183
    %v274 = vpop.f32.mrb[0].mxu0
    %v275 = vadd.f32 0.0, %v274
    %v276 = vpop.f32.mrb[0].mxu0
    %277 = vmatprep.mubr.f32.mxu0 0.0
    %278 = vmatmul.mubr.f32.gmra.mrb[0].mxu0 %v186
    %v279 = vpop.f32.mrb[0].mxu0
    %v280 = vadd.f32 0.0, %v279
    %v281 = vpop.f32.mrb[0].mxu0
    %282 = vmatprep.mubr.f32.mxu0 0.0
    %283 = vmatmul.mubr.f32.gmra.mrb[0].mxu0 %v189
    %v284 = vpop.f32.mrb[0].mxu0
    %v285 = vadd.f32 0.0, %v284
    %v286 = vpop.f32.mrb[0].mxu0
    %287 = vmatprep.mubr.f32.mxu0 0.0
    %288 = vmatmul.mubr.f32.gmra.mrb[0].mxu0 %v192
    %v289 = vpop.f32.mrb[0].mxu0
    %v290 = vadd.f32 0.0, %v289
    %v291 = vpop.f32.mrb[0].mxu0
    %292 = vmatprep.mubr.f32.mxu0 0.0
    %293 = vmatmul.mubr.f32.gmra.mrb[0].mxu0 %v195
    %v294 = vpop.f32.mrb[0].mxu0
    %v295 = vadd.f32 0.0, %v294
    %v296 = vpop.f32.mrb[0].mxu0
    %297 = vmatprep.mubr.f32.mxu0 0.0
    %298 = vmatmul.mubr.f32.gmra.mrb[0].mxu0 %v198
    %v299 = vpop.f32.mrb[0].mxu0
    %v300 = vadd.f32 0.0, %v299
    %v301 = vpop.f32.mrb[0].mxu0
    %302 = vmatprep.mubr.f32.mxu0 0.0
    %303 = vmatmul.mubr.f32.gmra.mrb[0].mxu0 %v201
    %v304 = vpop.f32.mrb[0].mxu0
    %v305 = vadd.f32 0.0, %v304
    %v306 = vpop.f32.mrb[0].mxu0
    %307 = vdwg.mxu0
    %v308 = vmul.f32 %v270, %v37
    %v309 = vmul.f32 %v275, %v38
    %v310 = vmul.f32 %v280, %v39
    %v311 = vmul.f32 %v285, %v40
    %v312 = vmul.f32 %v290, %v41
    %v313 = vmul.f32 %v295, %v42
    %v314 = vmul.f32 %v300, %v43
    %v315 = vmul.f32 %v305, %v44
    %316 = vrot.lane.b32.xlu0 %v156, 64
    %v317 = vpop.permute.xlu0 %316
    %318 = vrot.lane.b32.xlu0 %v159, 64
    %v319 = vpop.permute.xlu0 %318
    %322 = vmatprep.subr.mxu0 0.0
    %323 = vmatpush1.msra.mxu0 %v317
    %324 = vmatprep.subr.mxu0 0.0
    %325 = vmatpush1.msra.mxu0 %v319
    %326 = vmatprep.subr.mxu0 0.0
    %327 = vmatpush1.msra.mxu0 0.0
    %328 = vmatprep.subr.mxu0 0.0
    %329 = vmatpush1.msra.mxu0 0.0
    %330 = vmatprep.subr.mxu0 0.0
    %331 = vmatpush1.msra.mxu0 0.0
    %332 = vmatprep.subr.mxu0 0.0
    %333 = vmatpush1.msra.mxu0 0.0
    %334 = vmatprep.subr.mxu0 0.0
    %335 = vmatpush1.msra.mxu0 0.0
    %336 = vmatprep.subr.mxu0 0.0
    %337 = vmatpush1.msra.mxu0 0.0
    %338 = vmatprep.subr.mxu0 0.0
    %339 = vmatpush1.msra.mxu0 0.0
    %340 = vmatprep.subr.mxu0 0.0
    %341 = vmatpush1.msra.mxu0 0.0
    %342 = vmatprep.subr.mxu0 0.0
    %343 = vmatpush1.msra.mxu0 0.0
    %344 = vmatprep.subr.mxu0 0.0
    %345 = vmatpush1.msra.mxu0 0.0
    %346 = vmatprep.subr.mxu0 0.0
    %347 = vmatpush1.msra.mxu0 0.0
    %348 = vmatprep.subr.mxu0 0.0
    %349 = vmatpush1.msra.mxu0 0.0
    %350 = vmatprep.subr.mxu0 0.0
    %351 = vmatpush1.msra.mxu0 0.0
    %352 = vmatprep.subr.mxu0 0.0
    %353 = vmatpush1.msra.mxu0 0.0
    %354 = vmatprep.subr.mxu0 0.0
    %355 = vmatpush1.msra.mxu0 0.0
    %356 = vmatprep.subr.mxu0 0.0
    %357 = vmatpush1.msra.mxu0 0.0
    %358 = vmatprep.subr.mxu0 0.0
    %359 = vmatpush1.msra.mxu0 0.0
    %360 = vmatprep.subr.mxu0 0.0
    %361 = vmatpush1.msra.mxu0 0.0
    %362 = vmatprep.subr.mxu0 0.0
    %363 = vmatpush1.msra.mxu0 0.0
    %364 = vmatprep.subr.mxu0 0.0
    %365 = vmatpush1.msra.mxu0 0.0
    %366 = vmatprep.subr.mxu0 0.0
    %367 = vmatpush1.msra.mxu0 0.0
    %368 = vmatprep.subr.mxu0 0.0
    %369 = vmatpush1.msra.mxu0 0.0
    %370 = vmatprep.subr.mxu0 0.0
    %371 = vmatpush1.msra.mxu0 0.0
    %372 = vmatprep.subr.mxu0 0.0
    %373 = vmatpush1.msra.mxu0 0.0
    %374 = vmatprep.subr.mxu0 0.0
    %375 = vmatpush1.msra.mxu0 0.0
    %376 = vmatprep.subr.mxu0 0.0
    %377 = vmatpush1.msra.mxu0 0.0
    %378 = vmatprep.subr.mxu0 0.0
    %379 = vmatpush1.msra.mxu0 0.0
    %380 = vmatprep.subr.mxu0 0.0
    %381 = vmatpush1.msra.mxu0 0.0
    %382 = vmatprep.subr.mxu0 0.0
    %383 = vmatpush1.msra.mxu0 0.0
    %384 = vmatprep.subr.mxu0 0.0
    %385 = vmatpush1.msra.mxu0 0.0
    %386 = vmatprep.mubr.f32.mxu0 0.0
    %387 = vmatmul.mubr.f32.gmra.mrb[0].mxu0 %v180
    %v388 = vpop.f32.mrb[0].mxu0
    %v389 = vadd.f32 0.0, %v388
    %v390 = vpop.f32.mrb[0].mxu0
    %391 = vmatprep.mubr.f32.mxu0 0.0
    %392 = vmatmul.mubr.f32.gmra.mrb[0].mxu0 %v183
    %v393 = vpop.f32.mrb[0].mxu0
    %v394 = vadd.f32 0.0, %v393
    %v395 = vpop.f32.mrb[0].mxu0
    %396 = vmatprep.mubr.f32.mxu0 0.0
    %397 = vmatmul.mubr.f32.gmra.mrb[0].mxu0 %v186
    %v398 = vpop.f32.mrb[0].mxu0
    %v399 = vadd.f32 0.0, %v398
    %v400 = vpop.f32.mrb[0].mxu0
    %401 = vmatprep.mubr.f32.mxu0 0.0
    %402 = vmatmul.mubr.f32.gmra.mrb[0].mxu0 %v189
    %v403 = vpop.f32.mrb[0].mxu0
    %v404 = vadd.f32 0.0, %v403
    %v405 = vpop.f32.mrb[0].mxu0
    %406 = vmatprep.mubr.f32.mxu0 0.0
    %407 = vmatmul.mubr.f32.gmra.mrb[0].mxu0 %v192
    %v408 = vpop.f32.mrb[0].mxu0
    %v409 = vadd.f32 0.0, %v408
    %v410 = vpop.f32.mrb[0].mxu0
    %411 = vmatprep.mubr.f32.mxu0 0.0
    %412 = vmatmul.mubr.f32.gmra.mrb[0].mxu0 %v195
    %v413 = vpop.f32.mrb[0].mxu0
    %v414 = vadd.f32 0.0, %v413
    %v415 = vpop.f32.mrb[0].mxu0
    %416 = vmatprep.mubr.f32.mxu0 0.0
    %417 = vmatmul.mubr.f32.gmra.mrb[0].mxu0 %v198
    %v418 = vpop.f32.mrb[0].mxu0
    %v419 = vadd.f32 0.0, %v418
    %v420 = vpop.f32.mrb[0].mxu0
    %421 = vmatprep.mubr.f32.mxu0 0.0
    %422 = vmatmul.mubr.f32.gmra.mrb[0].mxu0 %v201
    %v423 = vpop.f32.mrb[0].mxu0
    %v424 = vadd.f32 0.0, %v423
    %v425 = vpop.f32.mrb[0].mxu0
    %426 = vdwg.mxu0
    %v427 = vmul.f32 %v389, %v37
    %v428 = vmul.f32 %v394, %v38
    %v429 = vmul.f32 %v399, %v39
    %v430 = vmul.f32 %v404, %v40
    %v431 = vmul.f32 %v409, %v41
    %v432 = vmul.f32 %v414, %v42
    %v433 = vmul.f32 %v419, %v43
    %v434 = vmul.f32 %v424, %v44
    %v435 = vpack.c.bf16 %v159, %v156
    %v436 = vpack.c.bf16 %v309, %v308
    %v437 = vpack.c.bf16 %v311, %v310
    %v438 = vpack.c.bf16 %v313, %v312
    %v439 = vpack.c.bf16 %v315, %v314
    %v440 = vld [vmem:[%s1] sm:$0xff]
    %v441 = vld [vmem:[%s1 + $0x8] sm:$0xff]
    %v443 = vsel %vm57, %v435, 0
    %v446 = vsel %vm57, %v436, 0
    %v449 = vsel %vm57, %v437, 0
    %v452 = vsel %vm57, %v438, 0
    %v455 = vsel %vm57, %v439, 0
    %457 = vmatprep.subr.bf16.mxu0 0
    %458 = vmatpush1.bf16.xpose.msra.mxu0 %v446
    %459 = vmatprep.subr.bf16.mxu0 0
    %460 = vmatpush1.bf16.xpose.msra.mxu0 %v449
    %461 = vmatprep.subr.bf16.mxu0 0
    %462 = vmatpush1.bf16.xpose.msra.mxu0 %v452
    %463 = vmatprep.subr.bf16.mxu0 0
    %464 = vmatpush1.bf16.xpose.msra.mxu0 %v455
    %465 = vmatprep.subr.bf16.mxu0 0
    %466 = vmatpush1.bf16.xpose.msra.mxu0 0
    %467 = vmatprep.subr.bf16.mxu0 0
    %468 = vmatpush1.bf16.xpose.msra.mxu0 0
    %469 = vmatprep.subr.bf16.mxu0 0
    %470 = vmatpush1.bf16.xpose.msra.mxu0 0
    %471 = vmatprep.subr.bf16.mxu0 0
    %472 = vmatpush1.bf16.xpose.msra.mxu0 0
    %473 = vmatprep.subr.bf16.mxu0 0
    %474 = vmatpush1.bf16.xpose.msra.mxu0 0
    %475 = vmatprep.subr.bf16.mxu0 0
    %476 = vmatpush1.bf16.xpose.msra.mxu0 0
    %477 = vmatprep.subr.bf16.mxu0 0
    %478 = vmatpush1.bf16.xpose.msra.mxu0 0
    %479 = vmatprep.subr.bf16.mxu0 0
    %480 = vmatpush1.bf16.xpose.msra.mxu0 0
    %481 = vmatprep.subr.bf16.mxu0 0
    %482 = vmatpush1.bf16.xpose.msra.mxu0 0
    %483 = vmatprep.subr.bf16.mxu0 0
    %484 = vmatpush1.bf16.xpose.msra.mxu0 0
    %485 = vmatprep.subr.bf16.mxu0 0
    %486 = vmatpush1.bf16.xpose.msra.mxu0 0
    %487 = vmatprep.subr.bf16.mxu0 0
    %488 = vmatpush1.bf16.xpose.msra.mxu0 0
    %489 = vmatprep.mubr.bf16.mxu0 0
    %490 = vmatmul.mubr.bf16.gmra.mrb[0].mxu0 %v443
    %v491 = vpop.f32.mrb[0].mxu0
    %v492 = vadd.f32 %v440, %v491
    %v493 = vpop.f32.mrb[0].mxu0
    %v494 = vpop.f32.mrb[0].mxu0
    %v495 = vadd.f32 %v441, %v494
    %v496 = vpop.f32.mrb[0].mxu0
    %497 = vdwg.mxu0
    %vm498 = vcmask 523264
    %v499 = vsel %vm498, %v492, -inf
    %500 = vmax.xlane.f32.xlu0 %v499
    %v501 = vpop.xlane.xlu0 %500
    %v502 = vsel %vm498, %v495, -inf
    %503 = vmax.xlane.f32.xlu0 %v502
    %v504 = vpop.xlane.xlu0 %503
    %v505 = vsub.f32 %v492, %v501
    %v506 = vsub.f32 %v495, %v504
    %v507 = vmul.f32 %v505, 1.442695
    %v508 = vpow.pop %v507
    %v509 = vmul.f32 %v506, 1.442695
    %v510 = vpow.pop %v509
    %v512 = vsel %vm498, %v508, 0
    %v515 = vsel %vm498, %v510, 0
    %517 = vmatprep.subr.mxu0 0.0
    %518 = vmatpush1.msra.mxu0 %v37
    %519 = vmatprep.subr.mxu0 0.0
    %520 = vmatpush1.msra.mxu0 %v38
    %521 = vmatprep.subr.mxu0 0.0
    %522 = vmatpush1.msra.mxu0 %v39
    %523 = vmatprep.subr.mxu0 0.0
    %524 = vmatpush1.msra.mxu0 %v40
    %525 = vmatprep.subr.mxu0 0.0
    %526 = vmatpush1.msra.mxu0 %v41
    %527 = vmatprep.subr.mxu0 0.0
    %528 = vmatpush1.msra.mxu0 %v42
    %529 = vmatprep.subr.mxu0 0.0
    %530 = vmatpush1.msra.mxu0 %v43
    %531 = vmatprep.subr.mxu0 0.0
    %532 = vmatpush1.msra.mxu0 %v44
    %533 = vmatprep.subr.mxu0 0.0
    %534 = vmatpush1.msra.mxu0 0.0
    %535 = vmatprep.subr.mxu0 0.0
    %536 = vmatpush1.msra.mxu0 0.0
    %537 = vmatprep.subr.mxu0 0.0
    %538 = vmatpush1.msra.mxu0 0.0
    %539 = vmatprep.subr.mxu0 0.0
    %540 = vmatpush1.msra.mxu0 0.0
    %541 = vmatprep.subr.mxu0 0.0
    %542 = vmatpush1.msra.mxu0 0.0
    %543 = vmatprep.subr.mxu0 0.0
    %544 = vmatpush1.msra.mxu0 0.0
    %545 = vmatprep.subr.mxu0 0.0
    %546 = vmatpush1.msra.mxu0 0.0
    %547 = vmatprep.subr.mxu0 0.0
    %548 = vmatpush1.msra.mxu0 0.0
    %549 = vmatprep.subr.mxu0 0.0
    %550 = vmatpush1.msra.mxu0 0.0
    %551 = vmatprep.subr.mxu0 0.0
    %552 = vmatpush1.msra.mxu0 0.0
    %553 = vmatprep.subr.mxu0 0.0
    %554 = vmatpush1.msra.mxu0 0.0
    %555 = vmatprep.subr.mxu0 0.0
    %556 = vmatpush1.msra.mxu0 0.0
    %557 = vmatprep.subr.mxu0 0.0
    %558 = vmatpush1.msra.mxu0 0.0
    %559 = vmatprep.subr.mxu0 0.0
    %560 = vmatpush1.msra.mxu0 0.0
    %561 = vmatprep.subr.mxu0 0.0
    %562 = vmatpush1.msra.mxu0 0.0
    %563 = vmatprep.subr.mxu0 0.0
    %564 = vmatpush1.msra.mxu0 0.0
    %565 = vmatprep.subr.mxu0 0.0
    %566 = vmatpush1.msra.mxu0 0.0
    %567 = vmatprep.subr.mxu0 0.0
    %568 = vmatpush1.msra.mxu0 0.0
    %569 = vmatprep.subr.mxu0 0.0
    %570 = vmatpush1.msra.mxu0 0.0
    %571 = vmatprep.subr.mxu0 0.0
    %572 = vmatpush1.msra.mxu0 0.0
    %573 = vmatprep.subr.mxu0 0.0
    %574 = vmatpush1.msra.mxu0 0.0
    %575 = vmatprep.subr.mxu0 0.0
    %576 = vmatpush1.msra.mxu0 0.0
    %577 = vmatprep.subr.mxu0 0.0
    %578 = vmatpush1.msra.mxu0 0.0
    %579 = vmatprep.subr.mxu0 0.0
    %580 = vmatpush1.msra.mxu0 0.0
    %581 = vmatprep.mubr.f32.mxu0 0.0
    %582 = vmatmul.mubr.f32.gmra.mrb[0].mxu0 %v512
    %v583 = vpop.f32.mrb[0].mxu0
    %v584 = vadd.f32 0.0, %v583
    %v585 = vpop.f32.mrb[0].mxu0
    %586 = vmatprep.mubr.f32.mxu0 0.0
    %587 = vmatmul.mubr.f32.gmra.mrb[0].mxu0 %v515
    %v588 = vpop.f32.mrb[0].mxu0
    %v589 = vadd.f32 0.0, %v588
    %v590 = vpop.f32.mrb[0].mxu0
    %591 = vdwg.mxu0
    %v592 = vmax.f32 %v584, 1e-30
    %v593 = vmax.f32 %v589, 1e-30
    %v594 = vpack.c.bf16 %v510, %v508
    %v595 = vpack.c.bf16 %v428, %v427
    %v596 = vpack.c.bf16 %v430, %v429
    %v597 = vpack.c.bf16 %v432, %v431
    %v598 = vpack.c.bf16 %v434, %v433
    %v600 = vsel %vm498, %v594, 0
    %602 = vmatprep.subr.bf16.mxu0 0
    %603 = vmatpush1.bf16.msra.mxu0 %v595
    %604 = vmatprep.subr.bf16.mxu0 0
    %605 = vmatpush1.bf16.msra.mxu0 %v596
    %606 = vmatprep.subr.bf16.mxu0 0
    %607 = vmatpush1.bf16.msra.mxu0 %v597
    %608 = vmatprep.subr.bf16.mxu0 0
    %609 = vmatpush1.bf16.msra.mxu0 %v598
    %610 = vmatprep.subr.bf16.mxu0 0
    %611 = vmatpush1.bf16.msra.mxu0 0
    %612 = vmatprep.subr.bf16.mxu0 0
    %613 = vmatpush1.bf16.msra.mxu0 0
    %614 = vmatprep.subr.bf16.mxu0 0
    %615 = vmatpush1.bf16.msra.mxu0 0
    %616 = vmatprep.subr.bf16.mxu0 0
    %617 = vmatpush1.bf16.msra.mxu0 0
    %618 = vmatprep.subr.bf16.mxu0 0
    %619 = vmatpush1.bf16.msra.mxu0 0
    %620 = vmatprep.subr.bf16.mxu0 0
    %621 = vmatpush1.bf16.msra.mxu0 0
    %622 = vmatprep.subr.bf16.mxu0 0
    %623 = vmatpush1.bf16.msra.mxu0 0
    %624 = vmatprep.subr.bf16.mxu0 0
    %625 = vmatpush1.bf16.msra.mxu0 0
    %626 = vmatprep.subr.bf16.mxu0 0
    %627 = vmatpush1.bf16.msra.mxu0 0
    %628 = vmatprep.subr.bf16.mxu0 0
    %629 = vmatpush1.bf16.msra.mxu0 0
    %630 = vmatprep.subr.bf16.mxu0 0
    %631 = vmatpush1.bf16.msra.mxu0 0
    %632 = vmatprep.subr.bf16.mxu0 0
    %633 = vmatpush1.bf16.msra.mxu0 0
    %634 = vmatprep.mubr.bf16.mxu0 0
    %635 = vmatmul.mubr.bf16.gmra.mrb[0].mxu0 %v600
    %v636 = vpop.f32.mrb[0].mxu0
    %v637 = vadd.f32 0.0, %v636
    %v638 = vpop.f32.mrb[0].mxu0
    %v639 = vpop.f32.mrb[0].mxu0
    %v640 = vadd.f32 0.0, %v639
    %v641 = vpop.f32.mrb[0].mxu0
    %642 = vdwg.mxu0
    %v643 = vrcp.pop %v592
    %v644 = vrcp.pop %v593
    %v645 = vmul.f32 %v637, %v643
    %v646 = vmul.f32 %v640, %v644
    %v647 = vpack.c.bf16 %v646, %v645
    %v648 = vlaneseq
    %v649 = vshrl.u32 %v648, 7
    %v650 = vsub.s32 0, %v649
    %v651 = vrot.slane %v35, %v650
    %v656 = vunpack.c.l.b16 %v51
    %v657 = vunpack.c.l.b16 %v52
    %v658 = vunpack.c.l.b16 %v53
    %v659 = vunpack.c.l.b16 %v54
    %v660 = vpack.c.b16 %v657, %v656
    %v661 = vpack.c.b16 %v659, %v658
    %v665 = vsel %vm57, %v647, 0
    %667 = vmatprep.subr.bf16.mxu0 0
    %668 = vmatpush1.bf16.msra.mxu0 %v660
    %669 = vmatprep.subr.bf16.mxu0 0
    %670 = vmatpush1.bf16.msra.mxu0 %v661
    %671 = vmatprep.subr.bf16.mxu0 0
    %672 = vmatpush1.bf16.msra.mxu0 0
    %673 = vmatprep.subr.bf16.mxu0 0
    %674 = vmatpush1.bf16.msra.mxu0 0
    %675 = vmatprep.subr.bf16.mxu0 0
    %676 = vmatpush1.bf16.msra.mxu0 0
    %677 = vmatprep.subr.bf16.mxu0 0
    %678 = vmatpush1.bf16.msra.mxu0 0
    %679 = vmatprep.subr.bf16.mxu0 0
    %680 = vmatpush1.bf16.msra.mxu0 0
    %681 = vmatprep.subr.bf16.mxu0 0
    %682 = vmatpush1.bf16.msra.mxu0 0
    %683 = vmatprep.subr.bf16.mxu0 0
    %684 = vmatpush1.bf16.msra.mxu0 0
    %685 = vmatprep.subr.bf16.mxu0 0
    %686 = vmatpush1.bf16.msra.mxu0 0
    %687 = vmatprep.subr.bf16.mxu0 0
    %688 = vmatpush1.bf16.msra.mxu0 0
    %689 = vmatprep.subr.bf16.mxu0 0
    %690 = vmatpush1.bf16.msra.mxu0 0
    %691 = vmatprep.subr.bf16.mxu0 0
    %692 = vmatpush1.bf16.msra.mxu0 0
    %693 = vmatprep.subr.bf16.mxu0 0
    %694 = vmatpush1.bf16.msra.mxu0 0
    %695 = vmatprep.subr.bf16.mxu0 0
    %696 = vmatpush1.bf16.msra.mxu0 0
    %697 = vmatprep.subr.bf16.mxu0 0
    %698 = vmatpush1.bf16.msra.mxu0 0
    %699 = vmatprep.mubr.bf16.mxu0 0
    %700 = vmatmul.mubr.bf16.gmra.mrb[0].mxu0 %v665
    %v701 = vpop.f32.mrb[0].mxu0
    %v702 = vadd.f32 %v651, %v701
    %v703 = vpop.f32.mrb[0].mxu0
    %v704 = vpop.f32.mrb[0].mxu0
    %v705 = vadd.f32 %v651, %v704
    %v706 = vpop.f32.mrb[0].mxu0
    %707 = vdwg.mxu0
    %v708 = vadd.f32 %v55, %v702
    %v709 = vadd.f32 %v56, %v705
    %v710 = vsel %vm57, %v708, 0.0
    %711 = vadd.xlane.f32.xlu0 %v710
    %v712 = vpop.xlane.xlu0 %711
    %v713 = vsel %vm57, %v709, 0.0
    %714 = vadd.xlane.f32.xlu0 %v713
    %v715 = vpop.xlane.xlu0 %714
    %v716 = vmul.f32 %v712, %v64
    %v717 = vmul.f32 %v715, %v64
    %v718 = vsub.f32 %v708, %v716
    %v719 = vsub.f32 %v709, %v717
    %v720 = vmul.f32 %v718, %v718
    %v721 = vmul.f32 %v719, %v719
    %v722 = vsel %vm57, %v720, 0.0
    %723 = vadd.xlane.f32.xlu0 %v722
    %v724 = vpop.xlane.xlu0 %723
    %v725 = vsel %vm57, %v721, 0.0
    %726 = vadd.xlane.f32.xlu0 %v725
    %v727 = vpop.xlane.xlu0 %726
    %v728 = vmul.f32 %v724, %v64
    %v729 = vmul.f32 %v727, %v64
    %v730 = vadd.f32 %v728, 1e-05
    %v731 = vadd.f32 %v729, 1e-05
    %v732 = vrsqrt.pop %v730
    %v733 = vrsqrt.pop %v731
    %v734 = vmul.f32 %v718, %v732
    %v735 = vmul.f32 %v719, %v733
    %v736 = vlaneseq
    %v737 = vshrl.u32 %v736, 7
    %v738 = vsub.s32 0, %v737
    %v739 = vrot.slane %v33, %v738
    %v740 = vmul.f32 %v734, %v739
    %v741 = vmul.f32 %v735, %v739
    %v742 = vlaneseq
    %v743 = vshrl.u32 %v742, 7
    %v744 = vsub.s32 0, %v743
    %v745 = vrot.slane %v34, %v744
    %v746 = vadd.f32 %v740, %v745
    %v747 = vadd.f32 %v741, %v745
    %v748 = vpack.c.bf16 %v747, %v746
    %v749 = vlaneseq
    %v750 = vshrl.u32 %v749, 7
    %v751 = vsub.s32 0, %v750
    %v752 = vrot.slane %v46, %v751
    %v757 = vunpack.c.l.b16 %v47
    %v758 = vunpack.c.l.b16 %v48
    %v759 = vunpack.c.l.b16 %v49
    %v760 = vunpack.c.l.b16 %v50
    %v761 = vpack.c.b16 %v758, %v757
    %v762 = vpack.c.b16 %v760, %v759
    %v766 = vsel %vm57, %v748, 0
    %768 = vmatprep.subr.bf16.mxu0 0
    %769 = vmatpush1.bf16.msra.mxu0 %v761
    %770 = vmatprep.subr.bf16.mxu0 0
    %771 = vmatpush1.bf16.msra.mxu0 %v762
    %772 = vmatprep.subr.bf16.mxu0 0
    %773 = vmatpush1.bf16.msra.mxu0 0
    %774 = vmatprep.subr.bf16.mxu0 0
    %775 = vmatpush1.bf16.msra.mxu0 0
    %776 = vmatprep.subr.bf16.mxu0 0
    %777 = vmatpush1.bf16.msra.mxu0 0
    %778 = vmatprep.subr.bf16.mxu0 0
    %779 = vmatpush1.bf16.msra.mxu0 0
    %780 = vmatprep.subr.bf16.mxu0 0
    %781 = vmatpush1.bf16.msra.mxu0 0
    %782 = vmatprep.subr.bf16.mxu0 0
    %783 = vmatpush1.bf16.msra.mxu0 0
    %784 = vmatprep.subr.bf16.mxu0 0
    %785 = vmatpush1.bf16.msra.mxu0 0
    %786 = vmatprep.subr.bf16.mxu0 0
    %787 = vmatpush1.bf16.msra.mxu0 0
    %788 = vmatprep.subr.bf16.mxu0 0
    %789 = vmatpush1.bf16.msra.mxu0 0
    %790 = vmatprep.subr.bf16.mxu0 0
    %791 = vmatpush1.bf16.msra.mxu0 0
    %792 = vmatprep.subr.bf16.mxu0 0
    %793 = vmatpush1.bf16.msra.mxu0 0
    %794 = vmatprep.subr.bf16.mxu0 0
    %795 = vmatpush1.bf16.msra.mxu0 0
    %796 = vmatprep.subr.bf16.mxu0 0
    %797 = vmatpush1.bf16.msra.mxu0 0
    %798 = vmatprep.subr.bf16.mxu0 0
    %799 = vmatpush1.bf16.msra.mxu0 0
    %800 = vmatprep.mubr.bf16.mxu0 0
    %801 = vmatmul.mubr.bf16.gmra.mrb[0].mxu0 %v766
    %v802 = vpop.f32.mrb[0].mxu0
    %v803 = vadd.f32 %v752, %v802
    %v804 = vpop.f32.mrb[0].mxu0
    %v805 = vpop.f32.mrb[0].mxu0
    %v806 = vadd.f32 %v752, %v805
    %v807 = vpop.f32.mrb[0].mxu0
    %808 = vdwg.mxu0
    %v809 = vmul.f32 %v803, 0.5
    %v810 = vmul.f32 %v806, 0.5
    %v811 = vmul.f32 %v803, 0.70710677
    %v812 = vmul.f32 %v806, 0.70710677
    %vm813 = vcmp.ge.f32.partialorder %v811, 0.0
    %vm814 = vcmp.ge.f32.partialorder %v812, 0.0
    %v815 = vsel %vm813, 1.0, -1.0
    %v816 = vsel %vm814, 1.0, -1.0
    %v817 = vand.u32 2147483647, %v811
    %v818 = vand.u32 2147483647, %v812
    %v819 = vmul.f32 %v817, 0.3275911
    %v820 = vmul.f32 %v818, 0.3275911
    %v821 = vadd.f32 %v819, 1.0
    %v822 = vadd.f32 %v820, 1.0
    %v823 = vrcp.pop %v821
    %v824 = vmul.f32 1.0, %v823
    %v825 = vrcp.pop %v822
    %v826 = vmul.f32 1.0, %v825
    %v827 = vmul.f32 %v824, 1.0614054
    %v828 = vmul.f32 %v826, 1.0614054
    %v829 = vadd.f32 %v827, -1.4531521
    %v830 = vadd.f32 %v828, -1.4531521
    %v831 = vmul.f32 %v829, %v824
    %v832 = vmul.f32 %v830, %v826
    %v833 = vadd.f32 %v831, 1.4214138
    %v834 = vadd.f32 %v832, 1.4214138
    %v835 = vmul.f32 %v833, %v824
    %v836 = vmul.f32 %v834, %v826
    %v837 = vadd.f32 %v835, -0.28449672
    %v838 = vadd.f32 %v836, -0.28449672
    %v839 = vmul.f32 %v837, %v824
    %v840 = vmul.f32 %v838, %v826
    %v841 = vadd.f32 %v839, 0.2548296
    %v842 = vadd.f32 %v840, 0.2548296
    %v843 = vmul.f32 %v841, %v824
    %v844 = vmul.f32 %v842, %v826
    %v845 = vsub.f32 0.0, %v817
    %v846 = vsub.f32 0.0, %v818
    %v847 = vmul.f32 %v845, %v817
    %v848 = vmul.f32 %v846, %v818
    %v849 = vmul.f32 %v847, 1.442695
    %v850 = vpow.pop %v849
    %v851 = vmul.f32 %v848, 1.442695
    %v852 = vpow.pop %v851
    %v853 = vmul.f32 %v843, %v850
    %v854 = vmul.f32 %v844, %v852
    %v855 = vsub.f32 1.0, %v853
    %v856 = vsub.f32 1.0, %v854
    %v857 = vmul.f32 %v815, %v855
    %v858 = vmul.f32 %v816, %v856
    %v859 = vadd.f32 %v857, 1.0
    %v860 = vadd.f32 %v858, 1.0
    %v861 = vmul.f32 %v809, %v859
    %v862 = vmul.f32 %v810, %v860
    %v863 = vpack.c.bf16 %v862, %v861
    %v864 = vld [vmem:[%s7] sm:$0xf]
    %v865 = vld [vmem:[%s7 + $0x4] sm:$0xf]
    %v866 = vld [vmem:[%s7 + $0x8] sm:$0xf]
    %v867 = vld [vmem:[%s7 + $0xc] sm:$0xf]
    %v868 = vld [vmem:[%s7 + $0x10] sm:$0xf]
    %v869 = vld [vmem:[%s7 + $0x14] sm:$0xf]
    %v870 = vld [vmem:[%s7 + $0x18] sm:$0xf]
    %v871 = vld [vmem:[%s7 + $0x1c] sm:$0xf]
    %v872 = vld [vmem:[%s7 + $0x20] sm:$0xf]
    %v873 = vld [vmem:[%s7 + $0x24] sm:$0xf]
    %v874 = vld [vmem:[%s7 + $0x28] sm:$0xf]
    %v875 = vld [vmem:[%s7 + $0x2c] sm:$0xf]
    %v876 = vld [vmem:[%s7 + $0x30] sm:$0xf]
    %v877 = vld [vmem:[%s7 + $0x34] sm:$0xf]
    %v878 = vld [vmem:[%s7 + $0x38] sm:$0xf]
    %v879 = vld [vmem:[%s7 + $0x3c] sm:$0xf]
    %v880 = vlaneseq
    %v881 = vshrl.u32 %v880, 7
    %v882 = vsub.s32 0, %v881
    %v883 = vrot.slane %v36, %v882
    %v900 = vunpack.c.l.b16 %v864
    %v901 = vunpack.c.l.b16 %v865
    %v902 = vunpack.c.l.b16 %v866
    %v903 = vunpack.c.l.b16 %v867
    %v904 = vunpack.c.l.b16 %v868
    %v905 = vunpack.c.l.b16 %v869
    %v906 = vunpack.c.l.b16 %v870
    %v907 = vunpack.c.l.b16 %v871
    %v908 = vunpack.c.l.b16 %v872
    %v909 = vunpack.c.l.b16 %v873
    %v910 = vunpack.c.l.b16 %v874
    %v911 = vunpack.c.l.b16 %v875
    %v912 = vunpack.c.l.b16 %v876
    %v913 = vunpack.c.l.b16 %v877
    %v914 = vunpack.c.l.b16 %v878
    %v915 = vunpack.c.l.b16 %v879
    %v916 = vpack.c.b16 %v901, %v900
    %v917 = vpack.c.b16 %v903, %v902
    %v918 = vpack.c.b16 %v905, %v904
    %v919 = vpack.c.b16 %v907, %v906
    %v920 = vpack.c.b16 %v909, %v908
    %v921 = vpack.c.b16 %v911, %v910
    %v922 = vpack.c.b16 %v913, %v912
    %v923 = vpack.c.b16 %v915, %v914
    %932 = vmatprep.subr.bf16.mxu0 0
    %933 = vmatpush1.bf16.msra.mxu0 %v916
    %934 = vmatprep.subr.bf16.mxu0 0
    %935 = vmatpush1.bf16.msra.mxu0 %v917
    %936 = vmatprep.subr.bf16.mxu0 0
    %937 = vmatpush1.bf16.msra.mxu0 %v918
    %938 = vmatprep.subr.bf16.mxu0 0
    %939 = vmatpush1.bf16.msra.mxu0 %v919
    %940 = vmatprep.subr.bf16.mxu0 0
    %941 = vmatpush1.bf16.msra.mxu0 %v920
    %942 = vmatprep.subr.bf16.mxu0 0
    %943 = vmatpush1.bf16.msra.mxu0 %v921
    %944 = vmatprep.subr.bf16.mxu0 0
    %945 = vmatpush1.bf16.msra.mxu0 %v922
    %946 = vmatprep.subr.bf16.mxu0 0
    %947 = vmatpush1.bf16.msra.mxu0 %v923
    %948 = vmatprep.subr.bf16.mxu0 0
    %949 = vmatpush1.bf16.msra.mxu0 0
    %950 = vmatprep.subr.bf16.mxu0 0
    %951 = vmatpush1.bf16.msra.mxu0 0
    %952 = vmatprep.subr.bf16.mxu0 0
    %953 = vmatpush1.bf16.msra.mxu0 0
    %954 = vmatprep.subr.bf16.mxu0 0
    %955 = vmatpush1.bf16.msra.mxu0 0
    %956 = vmatprep.subr.bf16.mxu0 0
    %957 = vmatpush1.bf16.msra.mxu0 0
    %958 = vmatprep.subr.bf16.mxu0 0
    %959 = vmatpush1.bf16.msra.mxu0 0
    %960 = vmatprep.subr.bf16.mxu0 0
    %961 = vmatpush1.bf16.msra.mxu0 0
    %962 = vmatprep.subr.bf16.mxu0 0
    %963 = vmatpush1.bf16.msra.mxu0 0
    %964 = vmatprep.mubr.bf16.mxu0 0
    %965 = vmatmul.mubr.bf16.gmra.mrb[0].mxu0 %v863
    %v966 = vpop.f32.mrb[0].mxu0
    %v967 = vadd.f32 %v883, %v966
    %v968 = vpop.f32.mrb[0].mxu0
    %v969 = vpop.f32.mrb[0].mxu0
    %v970 = vadd.f32 %v883, %v969
    %v971 = vpop.f32.mrb[0].mxu0
    %972 = vdwg.mxu0
    %v973 = vadd.f32 %v708, %v967
    %v974 = vadd.f32 %v709, %v970
    %975 = vst.msk [vmem:[#allocation2] sm:$0xff] %vm57, %v973
    %976 = vst.msk [vmem:[#allocation2 + $0x8] sm:$0xff] %vm57, %v974
    // Predicated region
    $region34: #{block_forward.1} parent=1 // pred_check
      _
    $region35: #{block_forward.1} parent=1 // pred_check_branch
      %978 = sbr.rel (0) target = $region37
    $region36: #{block_forward.1} parent=1 // pred_region
      %s980 = ssub.s32 256, 256
      %981 = vsyncadd [#allocation3], %s980
      %s982 = sshll.u32 [#allocation2], 4
      %s983 = int_to_ptr.vmem [resolvable:$true] %s982
      %988 = dma.vmem_to_hbm [thread:$0]  %s983, 256, %s8, [#allocation3], 128, 128, 8
    $region37: #{block_forward.1} parent=1 // pred_fallthru
      _
    // Predicated region
    $region38: #{block_forward.1} parent=1 // pred_check
      _
    $region39: #{block_forward.1} parent=1 // pred_check_branch
      %990 = sbr.rel (0) target = $region41
    $region40: #{block_forward.1} parent=1 // pred_region
      %991 = dma.done [#allocation3], 256
    $region41: #{block_forward.1} parent=1 // pred_fallthru
      _
    %992 = vsyncpa [#allocation3], 1

</llo_original>
